<compile_context>
chip_gen: v7x
topology: tpu7x:2x2x1
jax: 0.10.0
libtpu: 0.0.40
codegen_flags: <defaults>
</compile_context>

<pallas_src>
import math
from functools import partial

import numpy as np
import jax
import jax.numpy as jnp
from jax.experimental import pallas as pl
from jax.experimental.pallas import tpu as pltpu


# ----------------------- generation-aware VMEM budgets ------------------------

def _select_budgets():
    """Pick (vmem_limit_bytes, mask_row_tile_cap) from the TPU generation."""
    vmem = None
    try:
        info = pltpu.get_tpu_info()
        for name in ("vmem_capacity_bytes", "vmem_size_bytes", "vmem_bytes"):
            val = getattr(info, name, None)
            if isinstance(val, int) and val > 0:
                vmem = val
                break
    except Exception:
        vmem = None
    if vmem is None:
        vmem = 64 << 20                    # conservative fallback (v7x per-TC)
    if vmem >= (100 << 20):                # v5e / v6e: 128 MiB physical VMEM
        return 96 << 20, 2048
    return 48 << 20, 1024                  # v7x: 64 MiB per TensorCore


_VMEM_LIMIT_BYTES, _ROW_TILE_CAP = _select_budgets()


# ------------------------- pure-python config helpers -------------------------

def decide_sparsity_ratios(max_layer, layer_sparse_ratio=0.8, initial_sparse_layer=2):
    return [min(1.0, layer_sparse_ratio ** (layer - initial_sparse_layer + 1))
            for layer in range(max_layer + 1)]


def initialize_weight_dict(max_layers, layer_weight_decay=0.0, reg_weight=1.0,
                           binary_weight=1.0, sparsity_weight=1.0):
    weight_dict = {}
    map_loss = {'regression': [], 'binary': [], 'sparsity': []}
    weight_dict['loss_reg'] = reg_weight
    for layer in range(0, max_layers + 1):
        map_loss['regression'].append(f'loss_reg_{layer}')
        weight_dict[f'loss_reg_{layer}'] = reg_weight * layer_weight_decay ** (max_layers - layer)
        if layer == max_layers:
            continue
        map_loss['binary'].append(f'loss_bin_{layer}')
        map_loss['sparsity'].append(f'loss_sparsity_{layer}')
        weight_dict[f'loss_bin_{layer}'] = binary_weight * layer_weight_decay ** (layer - 1)
        weight_dict[f'loss_sparsity_{layer}'] = sparsity_weight * layer_weight_decay ** (layer - 1)
    return weight_dict, map_loss


def _bilinear_matrix(out_size, in_size):
    """Row interpolation matrix matching F.interpolate(mode='bilinear', align_corners=False)."""
    scale = in_size / out_size
    i = np.arange(out_size)
    src = (i + 0.5) * scale - 0.5
    src = np.maximum(src, 0.0)                       # PyTorch clamps negatives to 0
    x0 = np.minimum(np.floor(src).astype(np.int64), in_size - 1)
    x1 = np.minimum(x0 + 1, in_size - 1)
    lam = (src - x0).astype(np.float32)
    A = np.zeros((out_size, in_size), dtype=np.float32)
    A[i, x0] += (1.0 - lam)
    A[i, x1] += lam
    return A


# ------------------------------ Pallas kernels --------------------------------

def _fused_regression_losses(feats, targets):
    """Per-layer mean |feat_v - bilinear_resize(targets, feat_v.shape[-2:])|.

    One pallas_call for ALL layers: grid = (layer, nc_block).  The target is
    folded to (H, NC*W); each per-layer resize is two lane-dense 2-D matmuls
        interp = A_h^v @ T_fold @ blockdiag(A_w^v.T)
    Zero padding (rows of A_h, output cols of each A_w^T block, extra NC
    slices) is exactly neutral for the |.| accumulation.
    """
    N, C, H, W = targets.shape
    NC = N * C
    L = len(feats)
    Hs = [int(f.shape[2]) for f in feats]
    Ws = [int(f.shape[3]) for f in feats]
    for f in feats:
        assert f.shape[0] == N and f.shape[1] == C
    HO, WO = max(Hs), max(Ws)

    # Lane-density-minimum nc tile (perf feedback: cap nc_tile, take more steps).
    def _min_tile(w):
        return 128 // math.gcd(128, w)
    u_w, u_wo = _min_tile(W), _min_tile(WO)
    nc_tile = u_w * u_wo // math.gcd(u_w, u_wo)
    nc_pad = ((NC + nc_tile - 1) // nc_tile) * nc_tile
    S = nc_pad // nc_tile

    # Static per-layer interpolation operands (bf16 for the MXU).
    ah_np = np.zeros((L, HO, H), np.float32)
    b_np = np.zeros((L, nc_tile * W, nc_tile * WO), np.float32)
    for i, (hv, wv) in enumerate(zip(Hs, Ws)):
        ah_np[i, :hv, :] = _bilinear_matrix(hv, H)
        awt = _bilinear_matrix(wv, W).T                       # (W, wv)
        for k in range(nc_tile):
            b_np[i, k * W:(k + 1) * W, k * WO:k * WO + wv] = awt
    ah = jnp.asarray(ah_np, dtype=jnp.bfloat16)
    bmat = jnp.asarray(b_np, dtype=jnp.bfloat16)

    # Folded target (shared across layers): (H, NC_pad*W), lane-dense, bf16.
    t = targets.reshape(NC, H, W).astype(jnp.float32)
    if nc_pad != NC:
        t = jnp.pad(t, ((0, nc_pad - NC), (0, 0), (0, 0)))
    t_fold = jnp.transpose(t, (1, 0, 2)).reshape(H, nc_pad * W).astype(jnp.bfloat16)

    # Folded + zero-padded features stacked over layers: (L, HO, NC_pad*WO), f32.
    f_list = []
    for f, hv, wv in zip(feats, Hs, Ws):
        x = f.reshape(NC, hv, wv).astype(jnp.float32)
        x = jnp.pad(x, ((0, nc_pad - NC), (0, HO - hv), (0, WO - wv)))
        f_list.append(jnp.transpose(x, (1, 0, 2)).reshape(HO, nc_pad * WO))
    f_slab = jnp.stack(f_list)

    def kernel(ah_ref, b_ref, t_ref, f_ref, o_ref, acc_ref):
        s = pl.program_id(1)

        @pl.when(s == 0)
        def _init():
            acc_ref[...] = jnp.zeros_like(acc_ref)

        # interp = A_h @ T_fold @ blockdiag(A_w^T): two lane-dense bf16 matmuls,
        # f32 accumulation; L1 accumulate is pure VPU elementwise.
        tmp = jnp.dot(ah_ref[...], t_ref[...], preferred_element_type=jnp.float32)
        interp = jnp.dot(tmp.astype(jnp.bfloat16), b_ref[...],
                         preferred_element_type=jnp.float32)
        acc_ref[...] += jnp.abs(f_ref[...] - interp)

        @pl.when(s == pl.num_programs(1) - 1)
        def _finalize():
            # Single cross-lane reduce; lane-dense (1,8,128) output slab.
            o_ref[...] = jnp.zeros((1, 8, 128), jnp.float32) + jnp.sum(acc_ref[...])

    out = pl.pallas_call(
        kernel,
        out_shape=jax.ShapeDtypeStruct((L, 8, 128), jnp.float32),
        grid_spec=pltpu.PrefetchScalarGridSpec(
            num_scalar_prefetch=0,
            grid=(L, S),
            in_specs=[
                pl.BlockSpec((None, HO, H), lambda l, s: (l, 0, 0)),                      # A_h^v
                pl.BlockSpec((None, nc_tile * W, nc_tile * WO), lambda l, s: (l, 0, 0)),  # blockdiag(A_w^v.T)
                pl.BlockSpec((H, nc_tile * W), lambda l, s: (0, s)),                      # folded target
                pl.BlockSpec((None, HO, nc_tile * WO), lambda l, s: (l, 0, s)),           # folded feature
            ],
            out_specs=pl.BlockSpec((1, 8, 128), lambda l, s: (l, 0, 0)),
            scratch_shapes=[pltpu.VMEM((HO, nc_tile * WO), jnp.float32)],
        ),
        compiler_params=pltpu.CompilerParams(
            dimension_semantics=("parallel", "arbitrary"),
            vmem_limit_bytes=_VMEM_LIMIT_BYTES),
    )(ah, bmat, t_fold, f_slab)

    denoms = jnp.asarray([N * C * hv * wv for hv, wv in zip(Hs, Ws)], jnp.float32)
    return out[:, 0, 0] / denoms                       # (L,) per-layer L1 means


def _mask_reductions_all(mask_list):
    """One fused pallas_call over ALL layers' masks -> list of (sin_mean, sum).

    Flat masks are concatenated (not padded to a common per-layer height) into
    one lane-dense (rows, 128) buffer; per-layer block offsets / step counts
    are scalar-prefetched and drive the index_map and a pl.when gate, so small
    layers carry no dead rows.  In-layer zero padding is neutral for sin & sum.
    """
    L = len(mask_list)
    counts = [int(np.prod(m.shape)) for m in mask_list]
    rows = [max(1, (c + 127) // 128) for c in counts]
    row_tile = min(_ROW_TILE_CAP, max(8, ((max(rows) + 7) // 8) * 8))
    steps = [max(1, (r + row_tile - 1) // row_tile) for r in rows]
    max_steps = int(max(steps))
    total_blocks = int(sum(steps))

    # Place the layer with the most steps last so off[v] + s never runs past
    # the end of the buffer (no clamp needed inside the index_map).
    order = list(np.argsort(np.asarray(steps), kind="stable"))
    offs = np.zeros((L,), np.int32)
    pieces = []
    pos = 0
    for idx in order:
        offs[idx] = pos
        flat = mask_list[idx].reshape(-1).astype(jnp.float32)
        flat = jnp.pad(flat, (0, steps[idx] * row_tile * 128 - counts[idx]))
        pieces.append(flat.reshape(steps[idx] * row_tile, 128))
        pos += steps[idx]
    buf = jnp.concatenate(pieces, axis=0)              # (total_blocks*row_tile, 128)

    off_arr = jnp.asarray(offs, jnp.int32)
    steps_arr = jnp.asarray(np.asarray(steps, dtype=np.int32))

    def kernel(off_ref, steps_ref, m_ref, sin_ref, sum_ref, acc_sin, acc_sum):
        v = pl.program_id(0)
        s = pl.program_id(1)

        @pl.when(s == 0)
        def _init():
            acc_sin[...] = jnp.zeros_like(acc_sin)
            acc_sum[...] = jnp.zeros_like(acc_sum)

        @pl.when(s < steps_ref[v])
        def _accum():
            m = m_ref[...]                              # (row_tile, 128)
            acc_sin[...] += jnp.sin(m * jnp.float32(np.pi))
            acc_sum[...] += m

        @pl.when(s == pl.num_programs(1) - 1)
        def _finalize():
            sin_ref[...] = jnp.zeros((1, 8, 128), jnp.float32) + jnp.sum(acc_sin[...])
            sum_ref[...] = jnp.zeros((1, 8, 128), jnp.float32) + jnp.sum(acc_sum[...])

    sin_out, sum_out = pl.pallas_call(
        kernel,
        out_shape=(jax.ShapeDtypeStruct((L, 8, 128), jnp.float32),
                   jax.ShapeDtypeStruct((L, 8, 128), jnp.float32)),
        grid_spec=pltpu.PrefetchScalarGridSpec(
            num_scalar_prefetch=2,
            grid=(L, max_steps),
            in_specs=[pl.BlockSpec((row_tile, 128),
                                   lambda v, s, off, st: (off[v] + s, 0))],
            out_specs=(pl.BlockSpec((1, 8, 128), lambda v, s, off, st: (v, 0, 0)),
                       pl.BlockSpec((1, 8, 128), lambda v, s, off, st: (v, 0, 0))),
            scratch_shapes=[pltpu.VMEM((row_tile, 128), jnp.float32),
                            pltpu.VMEM((row_tile, 128), jnp.float32)],
        ),
        compiler_params=pltpu.CompilerParams(
            dimension_semantics=("parallel", "arbitrary"),
            vmem_limit_bytes=_VMEM_LIMIT_BYTES),
    )(off_arr, steps_arr, buf)

    return [(sin_out[i, 0, 0] / jnp.float32(counts[i]), sum_out[i, 0, 0])
            for i in range(L)]


# ------------------------------- SetCriterion ---------------------------------

class SetCriterionPallas:
    """JAX/Pallas port of SetCriterion (regression / binary / sparsity losses)."""

    def __init__(self, max_layers, losses=('regression', 'binary', 'sparsity'),
                 layer_weight_decay=0.0, reg_weight=1.0, binary_weight=1.0,
                 sparsity_weight=1.0, layer_sparse_ratio=1.0, initial_sparse_layer=2):
        self.max_layers = max_layers
        self.losses = list(losses)
        self.layer_weight_decay = layer_weight_decay
        self.reg_weight = reg_weight
        self.binary_weight = binary_weight
        self.sparsity_weight = sparsity_weight
        self.layer_sparse_ratio = layer_sparse_ratio
        self.initial_sparse_layer = initial_sparse_layer
        self.weight_dict, self.map_loss = initialize_weight_dict(
            max_layers, layer_weight_decay, reg_weight, binary_weight, sparsity_weight)
        self.sparsity_ratios = decide_sparsity_ratios(
            max_layers, layer_sparse_ratio, initial_sparse_layer)
        self._jit_cache = {}

    def update(self, layer_weight_decay=None, reg_weight=None, binary_weight=None,
               sparsity_weight=None, layer_sparse_ratio=None, initial_sparse_layer=None):
        if layer_weight_decay is not None:
            self.layer_weight_decay = layer_weight_decay
        if reg_weight is not None:
            self.reg_weight = reg_weight
        if binary_weight is not None:
            self.binary_weight = binary_weight
        if sparsity_weight is not None:
            self.sparsity_weight = sparsity_weight
        if layer_sparse_ratio is not None:
            self.layer_sparse_ratio = layer_sparse_ratio
        if initial_sparse_layer is not None:
            self.initial_sparse_layer = initial_sparse_layer
        self.weight_dict, self.map_loss = initialize_weight_dict(
            self.max_layers, self.layer_weight_decay, self.reg_weight,
            self.binary_weight, self.sparsity_weight)
        self.sparsity_ratios = decide_sparsity_ratios(
            self.max_layers, self.layer_sparse_ratio, self.initial_sparse_layer)

    # ---- traced implementation (runs under jax.jit) --------------------------
    def _forward_impl(self, layer_keys, feats, masks, targets):
        per_layer = {}
        if 'regression' in self.losses:
            reg = _fused_regression_losses(feats, targets)          # one kernel, all layers
            for i, v in enumerate(layer_keys):
                per_layer[f'loss_reg_{v}'] = reg[i]
        if ('binary' in self.losses) or ('sparsity' in self.losses):
            stats = _mask_reductions_all(masks)                     # one kernel, reused twice
            for i, v in enumerate(layer_keys):
                sin_mean, msum = stats[i]
                per_layer[f'loss_bin_{v}'] = sin_mean
                per_layer[f'loss_sparsity_{v}'] = jnp.abs(
                    msum / jnp.float32(4.0 ** v)
                    - jnp.float32(1.0 - self.sparsity_ratios[v]))

        losses = {}
        for loss_desc in self.losses:
            assert loss_desc in ('regression', 'binary', 'sparsity'), \
                f'do you really want to compute {loss_desc} loss?'
            for loss_name in self.map_loss[loss_desc]:
                assert loss_name in per_layer
                assert loss_name in self.weight_dict
                loss_val = per_layer[loss_name]
                loss_weight = self.weight_dict.get(loss_name, 1.0)
                losses[loss_name] = loss_val
                losses['weighted_' + loss_name] = loss_val * loss_weight
        total_loss = sum(v for k, v in losses.items() if k.startswith('weighted'))
        total_prod = jnp.asarray(1.0, dtype=jnp.float32)
        for k, v in losses.items():
            if k.startswith('weighted'):
                total_prod = total_prod * v
        losses['total_loss'] = total_loss
        losses['total_prod'] = total_prod
        return losses

    # ---- public entry ---------------------------------------------------------
    def forward(self, outputs, targets):
        # mirrors the PyTorch loss_regression assert; 'ensemble_feature' is otherwise unused.
        assert 'ensemble_feature' in outputs
        layer_keys = tuple(sorted(v for v in outputs if isinstance(v, int)))
        feats = tuple(outputs[v]['feature'] for v in layer_keys)
        masks = tuple(outputs[v]['mask_detail'] for v in layer_keys)
        sig = (layer_keys,
               tuple((tuple(f.shape), str(f.dtype)) for f in feats),
               tuple((tuple(m.shape), str(m.dtype)) for m in masks),
               tuple(targets.shape), str(targets.dtype),
               tuple(self.losses),
               tuple(sorted(self.weight_dict.items())),
               tuple(self.sparsity_ratios))
        fn = self._jit_cache.get(sig)
        if fn is None:
            fn = jax.jit(partial(self._forward_impl, layer_keys))
            self._jit_cache[sig] = fn
        return fn(feats, masks, targets)

    __call__ = forward


# ----------------------------------- main --------------------------------------

if __name__ == "__main__":
    key = jax.random.PRNGKey(0)
    N, C, H, W = 2, 4, 16, 16
    max_layers = 2

    keys = jax.random.split(key, 1 + 2 * (max_layers + 1))
    targets = jax.random.normal(keys[0], (N, C, H, W), jnp.float32)

    outputs = {'ensemble_feature': targets}
    kidx = 1
    for v in range(max_layers + 1):
        hv, wv = H // (2 ** v), W // (2 ** v)
        feat = jax.random.normal(keys[kidx], (N, C, hv, wv), jnp.float32); kidx += 1
        mask = jax.random.uniform(keys[kidx], (N, 1, hv, wv), jnp.float32); kidx += 1
        outputs[v] = {'feature': feat, 'mask_detail': mask}

    criterion = SetCriterionPallas(max_layers=max_layers, layer_weight_decay=0.5,
                                   layer_sparse_ratio=0.8, initial_sparse_layer=2)
    losses = criterion.forward(outputs, targets)

    jax.block_until_ready(losses['total_loss'])
    jax.block_until_ready(losses['total_prod'])
    print("KERNEL_OK")
</pallas_src>

<mosaic_0001>
module attributes {stable_mosaic.version = 11 : i64} {
  func.func @kernel(%arg0: i32, %arg1: i32, %arg2: memref<1x16x16xbf16, #tpu.memory_space<vmem>>, %arg3: memref<1x128x128xbf16, #tpu.memory_space<vmem>>, %arg4: memref<16x128xbf16, #tpu.memory_space<vmem>>, %arg5: memref<1x16x128xf32, #tpu.memory_space<vmem>>, %arg6: memref<1x8x128xf32, #tpu.memory_space<vmem>>, %arg7: memref<16x128xf32, #tpu.memory_space<vmem>>) attributes {dimension_semantics = [#tpu.dimension_semantics<parallel>, #tpu.dimension_semantics<arbitrary>], iteration_bounds = array<i64: 3, 1>, scalar_prefetch = 0 : i64, scratch_operands = 1 : i64, tpu.core_type = #tpu.core_type<tc>, window_params = [{transform_indices = @transform_0, window_bounds = array<i64: 1, 16, 16>}, {transform_indices = @transform_1, window_bounds = array<i64: 1, 128, 128>}, {transform_indices = @transform_2, window_bounds = array<i64: 16, 128>}, {transform_indices = @transform_3, window_bounds = array<i64: 1, 16, 128>}, {transform_indices = @transform_4, window_bounds = array<i64: 1, 8, 128>}]} {
    %c0_i32 = arith.constant 0 : i32
    %0 = arith.cmpi eq, %arg1, %c0_i32 : i32
    %1 = arith.extui %0 : i1 to i32
    %c0_i32_0 = arith.constant 0 : i32
    %2 = arith.cmpi ne, %1, %c0_i32_0 : i32
    scf.if %2 {
      %cst_18 = arith.constant 0.000000e+00 : f32
      %21 = vector.broadcast %cst_18 : f32 to vector<16x128xf32>
      %c0_19 = arith.constant 0 : index
      %c0_20 = arith.constant 0 : index
      %22 = vector.load %arg7[%c0_19, %c0_20] : memref<16x128xf32, #tpu.memory_space<vmem>>, vector<16x128xf32>
      tpu.vector_store %arg7[%c0_19, %c0_20], %21 {strides = array<i32>} : memref<16x128xf32, #tpu.memory_space<vmem>>, vector<16x128xf32>,
    } else {
    }
    %c0 = arith.constant 0 : index
    %c0_1 = arith.constant 0 : index
    %c0_2 = arith.constant 0 : index
    %3 = vector.load %arg2[%c0, %c0_1, %c0_2] : memref<1x16x16xbf16, #tpu.memory_space<vmem>>, vector<1x16x16xbf16>
    %4 = vector.shape_cast %3 : vector<1x16x16xbf16> to vector<16x16xbf16>
    %c0_3 = arith.constant 0 : index
    %c0_4 = arith.constant 0 : index
    %5 = vector.load %arg4[%c0_3, %c0_4] : memref<16x128xbf16, #tpu.memory_space<vmem>>, vector<16x128xbf16>
    %cst = arith.constant dense<0.000000e+00> : vector<16x128xf32>
    %6 = tpu.matmul %4, %5, %cst {dimension_numbers = #tpu.dot_dimension_numbers<[1], [0], [0], [1], [0, 0, 1, 1], [], []>} : vector<16x16xbf16>, vector<16x128xbf16>, vector<16x128xf32> -> vector<16x128xf32>
    %7 = arith.truncf %6 : vector<16x128xf32> to vector<16x128xbf16>
    %c0_5 = arith.constant 0 : index
    %c0_6 = arith.constant 0 : index
    %c0_7 = arith.constant 0 : index
    %8 = vector.load %arg3[%c0_5, %c0_6, %c0_7] : memref<1x128x128xbf16, #tpu.memory_space<vmem>>, vector<1x128x128xbf16>
    %9 = vector.shape_cast %8 : vector<1x128x128xbf16> to vector<128x128xbf16>
    %cst_8 = arith.constant dense<0.000000e+00> : vector<16x128xf32>
    %10 = tpu.matmul %7, %9, %cst_8 {dimension_numbers = #tpu.dot_dimension_numbers<[1], [0], [0], [1], [0, 0, 1, 1], [], []>} : vector<16x128xbf16>, vector<128x128xbf16>, vector<16x128xf32> -> vector<16x128xf32>
    %c0_9 = arith.constant 0 : index
    %c0_10 = arith.constant 0 : index
    %11 = vector.load %arg7[%c0_9, %c0_10] : memref<16x128xf32, #tpu.memory_space<vmem>>, vector<16x128xf32>
    %c0_11 = arith.constant 0 : index
    %c0_12 = arith.constant 0 : index
    %c0_13 = arith.constant 0 : index
    %12 = vector.load %arg5[%c0_11, %c0_12, %c0_13] : memref<1x16x128xf32, #tpu.memory_space<vmem>>, vector<1x16x128xf32>
    %13 = vector.shape_cast %12 : vector<1x16x128xf32> to vector<16x128xf32>
    %14 = arith.subf %13, %10 : vector<16x128xf32>
    %15 = math.absf %14 : vector<16x128xf32>
    %16 = arith.addf %11, %15 : vector<16x128xf32>
    %c0_14 = arith.constant 0 : index
    %c0_15 = arith.constant 0 : index
    %17 = vector.load %arg7[%c0_14, %c0_15] : memref<16x128xf32, #tpu.memory_space<vmem>>, vector<16x128xf32>
    tpu.vector_store %arg7[%c0_14, %c0_15], %16 {strides = array<i32>} : memref<16x128xf32, #tpu.memory_space<vmem>>, vector<16x128xf32>,
    %c0_i32_16 = arith.constant 0 : i32
    %18 = arith.cmpi eq, %arg1, %c0_i32_16 : i32
    %19 = arith.extui %18 : i1 to i32
    %c0_i32_17 = arith.constant 0 : i32
    %20 = arith.cmpi ne, %19, %c0_i32_17 : i32
    scf.if %20 {
      %cst_18 = arith.constant 0.000000e+00 : f32
      %21 = vector.broadcast %cst_18 : f32 to vector<1x8x128xf32>
      %c0_19 = arith.constant 0 : index
      %c0_20 = arith.constant 0 : index
      %22 = vector.load %arg7[%c0_19, %c0_20] : memref<16x128xf32, #tpu.memory_space<vmem>>, vector<16x128xf32>
      %23 = vector.shape_cast %22 : vector<16x128xf32> to vector<1x16x128xf32>
      %cst_21 = arith.constant dense<0.000000e+00> : vector<1xf32>
      %24 = vector.multi_reduction <add>, %23, %cst_21 [1, 2] : vector<1x16x128xf32> to vector<1xf32>
      %25 = vector.shape_cast %24 : vector<1xf32> to vector<1x1x1xf32>
      %26 = vector.extract %25[0, 0, 0] : f32 from vector<1x1x1xf32>
      %27 = vector.broadcast %26 : f32 to vector<1x8x128xf32>
      %28 = arith.addf %21, %27 : vector<1x8x128xf32>
      %c0_22 = arith.constant 0 : index
      %c0_23 = arith.constant 0 : index
      %c0_24 = arith.constant 0 : index
      %29 = vector.load %arg6[%c0_22, %c0_23, %c0_24] : memref<1x8x128xf32, #tpu.memory_space<vmem>>, vector<1x8x128xf32>
      tpu.vector_store %arg6[%c0_22, %c0_23, %c0_24], %28 {strides = array<i32>} : memref<1x8x128xf32, #tpu.memory_space<vmem>>, vector<1x8x128xf32>,
    } else {
    }
    return
  }
  func.func @transform_0(%arg0: i32, %arg1: i32) -> (i32, i32, i32) {
    %c0_i32 = arith.constant 0 : i32
    %c0_i32_0 = arith.constant 0 : i32
    %c0_i32_1 = arith.constant 0 : i32
    return %arg0, %c0_i32, %c0_i32_0 : i32, i32, i32
  }
  func.func @transform_1(%arg0: i32, %arg1: i32) -> (i32, i32, i32) {
    %c0_i32 = arith.constant 0 : i32
    %c0_i32_0 = arith.constant 0 : i32
    %c0_i32_1 = arith.constant 0 : i32
    return %arg0, %c0_i32, %c0_i32_0 : i32, i32, i32
  }
  func.func @transform_2(%arg0: i32, %arg1: i32) -> (i32, i32) {
    %c0_i32 = arith.constant 0 : i32
    %c0_i32_0 = arith.constant 0 : i32
    return %c0_i32, %arg1 : i32, i32
  }
  func.func @transform_3(%arg0: i32, %arg1: i32) -> (i32, i32, i32) {
    %c0_i32 = arith.constant 0 : i32
    %c0_i32_0 = arith.constant 0 : i32
    return %arg0, %c0_i32, %arg1 : i32, i32, i32
  }
  func.func @transform_4(%arg0: i32, %arg1: i32) -> (i32, i32, i32) {
    %c0_i32 = arith.constant 0 : i32
    %c0_i32_0 = arith.constant 0 : i32
    %c0_i32_1 = arith.constant 0 : i32
    return %arg0, %c0_i32, %c0_i32_0 : i32, i32, i32
  }
}

module attributes {stable_mosaic.version = 11 : i64} {
  func.func @kernel(%arg0: i32, %arg1: i32, %arg2: memref<3xi32, #tpu.memory_space<smem>>, %arg3: memref<3xi32, #tpu.memory_space<smem>>, %arg4: memref<8x128xf32, #tpu.memory_space<vmem>>, %arg5: memref<1x8x128xf32, #tpu.memory_space<vmem>>, %arg6: memref<1x8x128xf32, #tpu.memory_space<vmem>>, %arg7: memref<8x128xf32, #tpu.memory_space<vmem>>, %arg8: memref<8x128xf32, #tpu.memory_space<vmem>>) attributes {dimension_semantics = [#tpu.dimension_semantics<parallel>, #tpu.dimension_semantics<arbitrary>], iteration_bounds = array<i64: 3, 1>, scalar_prefetch = 2 : i64, scratch_operands = 2 : i64, tpu.core_type = #tpu.core_type<tc>, window_params = [{transform_indices = @transform_0, window_bounds = array<i64: 8, 128>}, {transform_indices = @transform_1, window_bounds = array<i64: 1, 8, 128>}, {transform_indices = @transform_2, window_bounds = array<i64: 1, 8, 128>}]} {
    %c0_i32 = arith.constant 0 : i32
    %0 = arith.cmpi eq, %arg1, %c0_i32 : i32
    %1 = arith.extui %0 : i1 to i32
    %c0_i32_0 = arith.constant 0 : i32
    %2 = arith.cmpi ne, %1, %c0_i32_0 : i32
    scf.if %2 {
      %cst = arith.constant 0.000000e+00 : f32
      %11 = vector.broadcast %cst : f32 to vector<8x128xf32>
      %c0 = arith.constant 0 : index
      %c0_4 = arith.constant 0 : index
      %12 = vector.load %arg7[%c0, %c0_4] : memref<8x128xf32, #tpu.memory_space<vmem>>, vector<8x128xf32>
      tpu.vector_store %arg7[%c0, %c0_4], %11 {strides = array<i32>} : memref<8x128xf32, #tpu.memory_space<vmem>>, vector<8x128xf32>,
      %cst_5 = arith.constant 0.000000e+00 : f32
      %13 = vector.broadcast %cst_5 : f32 to vector<8x128xf32>
      %c0_6 = arith.constant 0 : index
      %c0_7 = arith.constant 0 : index
      %14 = vector.load %arg8[%c0_6, %c0_7] : memref<8x128xf32, #tpu.memory_space<vmem>>, vector<8x128xf32>
      tpu.vector_store %arg8[%c0_6, %c0_7], %13 {strides = array<i32>} : memref<8x128xf32, #tpu.memory_space<vmem>>, vector<8x128xf32>,
    } else {
    }
    %3 = arith.index_cast %arg0 : i32 to index
    %4 = memref.load %arg3[%3] : memref<3xi32, #tpu.memory_space<smem>>
    %5 = arith.cmpi slt, %arg1, %4 : i32
    %6 = arith.extui %5 : i1 to i32
    %c0_i32_1 = arith.constant 0 : i32
    %7 = arith.cmpi ne, %6, %c0_i32_1 : i32
    scf.if %7 {
      %c0 = arith.constant 0 : index
      %c0_4 = arith.constant 0 : index
      %11 = vector.load %arg4[%c0, %c0_4] : memref<8x128xf32, #tpu.memory_space<vmem>>, vector<8x128xf32>
      %c0_5 = arith.constant 0 : index
      %c0_6 = arith.constant 0 : index
      %12 = vector.load %arg7[%c0_5, %c0_6] : memref<8x128xf32, #tpu.memory_space<vmem>>, vector<8x128xf32>
      %cst = arith.constant 3.14159274 : f32
      %13 = vector.broadcast %cst : f32 to vector<8x128xf32>
      %14 = arith.mulf %11, %13 : vector<8x128xf32>
      %15 = math.sin %14 : vector<8x128xf32>
      %16 = arith.addf %12, %15 : vector<8x128xf32>
      %c0_7 = arith.constant 0 : index
      %c0_8 = arith.constant 0 : index
      %17 = vector.load %arg7[%c0_7, %c0_8] : memref<8x128xf32, #tpu.memory_space<vmem>>, vector<8x128xf32>
      tpu.vector_store %arg7[%c0_7, %c0_8], %16 {strides = array<i32>} : memref<8x128xf32, #tpu.memory_space<vmem>>, vector<8x128xf32>,
      %c0_9 = arith.constant 0 : index
      %c0_10 = arith.constant 0 : index
      %18 = vector.load %arg8[%c0_9, %c0_10] : memref<8x128xf32, #tpu.memory_space<vmem>>, vector<8x128xf32>
      %19 = arith.addf %18, %11 : vector<8x128xf32>
      %c0_11 = arith.constant 0 : index
      %c0_12 = arith.constant 0 : index
      %20 = vector.load %arg8[%c0_11, %c0_12] : memref<8x128xf32, #tpu.memory_space<vmem>>, vector<8x128xf32>
      tpu.vector_store %arg8[%c0_11, %c0_12], %19 {strides = array<i32>} : memref<8x128xf32, #tpu.memory_space<vmem>>, vector<8x128xf32>,
    } else {
    }
    %c0_i32_2 = arith.constant 0 : i32
    %8 = arith.cmpi eq, %arg1, %c0_i32_2 : i32
    %9 = arith.extui %8 : i1 to i32
    %c0_i32_3 = arith.constant 0 : i32
    %10 = arith.cmpi ne, %9, %c0_i32_3 : i32
    scf.if %10 {
      %cst = arith.constant 0.000000e+00 : f32
      %11 = vector.broadcast %cst : f32 to vector<1x8x128xf32>
      %c0 = arith.constant 0 : index
      %c0_4 = arith.constant 0 : index
      %12 = vector.load %arg7[%c0, %c0_4] : memref<8x128xf32, #tpu.memory_space<vmem>>, vector<8x128xf32>
      %13 = vector.shape_cast %12 : vector<8x128xf32> to vector<1x8x128xf32>
      %cst_5 = arith.constant dense<0.000000e+00> : vector<1xf32>
      %14 = vector.multi_reduction <add>, %13, %cst_5 [1, 2] : vector<1x8x128xf32> to vector<1xf32>
      %15 = vector.shape_cast %14 : vector<1xf32> to vector<1x1x1xf32>
      %16 = vector.extract %15[0, 0, 0] : f32 from vector<1x1x1xf32>
      %17 = vector.broadcast %16 : f32 to vector<1x8x128xf32>
      %18 = arith.addf %11, %17 : vector<1x8x128xf32>
      %c0_6 = arith.constant 0 : index
      %c0_7 = arith.constant 0 : index
      %c0_8 = arith.constant 0 : index
      %19 = vector.load %arg5[%c0_6, %c0_7, %c0_8] : memref<1x8x128xf32, #tpu.memory_space<vmem>>, vector<1x8x128xf32>
      tpu.vector_store %arg5[%c0_6, %c0_7, %c0_8], %18 {strides = array<i32>} : memref<1x8x128xf32, #tpu.memory_space<vmem>>, vector<1x8x128xf32>,
      %cst_9 = arith.constant 0.000000e+00 : f32
      %20 = vector.broadcast %cst_9 : f32 to vector<1x8x128xf32>
      %c0_10 = arith.constant 0 : index
      %c0_11 = arith.constant 0 : index
      %21 = vector.load %arg8[%c0_10, %c0_11] : memref<8x128xf32, #tpu.memory_space<vmem>>, vector<8x128xf32>
      %22 = vector.shape_cast %21 : vector<8x128xf32> to vector<1x8x128xf32>
      %cst_12 = arith.constant dense<0.000000e+00> : vector<1xf32>
      %23 = vector.multi_reduction <add>, %22, %cst_12 [1, 2] : vector<1x8x128xf32> to vector<1xf32>
      %24 = vector.shape_cast %23 : vector<1xf32> to vector<1x1x1xf32>
      %25 = vector.extract %24[0, 0, 0] : f32 from vector<1x1x1xf32>
      %26 = vector.broadcast %25 : f32 to vector<1x8x128xf32>
      %27 = arith.addf %20, %26 : vector<1x8x128xf32>
      %c0_13 = arith.constant 0 : index
      %c0_14 = arith.constant 0 : index
      %c0_15 = arith.constant 0 : index
      %28 = vector.load %arg6[%c0_13, %c0_14, %c0_15] : memref<1x8x128xf32, #tpu.memory_space<vmem>>, vector<1x8x128xf32>
      tpu.vector_store %arg6[%c0_13, %c0_14, %c0_15], %27 {strides = array<i32>} : memref<1x8x128xf32, #tpu.memory_space<vmem>>, vector<1x8x128xf32>,
    } else {
    }
    return
  }
  func.func @transform_0(%arg0: i32, %arg1: i32, %arg2: memref<3xi32, #tpu.memory_space<smem>>, %arg3: memref<3xi32, #tpu.memory_space<smem>>) -> (i32, i32) {
    %0 = arith.index_cast %arg0 : i32 to index
    %1 = memref.load %arg2[%0] : memref<3xi32, #tpu.memory_space<smem>>
    %2 = arith.addi %1, %arg1 : i32
    %c0_i32 = arith.constant 0 : i32
    %c0_i32_0 = arith.constant 0 : i32
    return %2, %c0_i32 : i32, i32
  }
  func.func @transform_1(%arg0: i32, %arg1: i32, %arg2: memref<3xi32, #tpu.memory_space<smem>>, %arg3: memref<3xi32, #tpu.memory_space<smem>>) -> (i32, i32, i32) {
    %c0_i32 = arith.constant 0 : i32
    %c0_i32_0 = arith.constant 0 : i32
    %c0_i32_1 = arith.constant 0 : i32
    return %arg0, %c0_i32, %c0_i32_0 : i32, i32, i32
  }
  func.func @transform_2(%arg0: i32, %arg1: i32, %arg2: memref<3xi32, #tpu.memory_space<smem>>, %arg3: memref<3xi32, #tpu.memory_space<smem>>) -> (i32, i32, i32) {
    %c0_i32 = arith.constant 0 : i32
    %c0_i32_0 = arith.constant 0 : i32
    %c0_i32_1 = arith.constant 0 : i32
    return %arg0, %c0_i32, %c0_i32_0 : i32, i32, i32
  }
}

</mosaic_0001>

<llo_original>
// kernel: _forward_impl.2
$region0: #{_forward_impl.2}
  #allocation0 [shape = 'u32[]', space=smem, size = 0x4, offset = 0x4, fixed_abs, tag = 'smem constant byte address 0x4 - core index']
  #allocation1 [shape = 'u32[144,128]{1,0:T(1,128)}', space=vmem, size = 0x12000, scoped, tag = 'internal scratch']
  #allocation2 [shape = 'f32[16,128]{1,0:T(8,128)}', space=vmem, size = 0x2000, scoped, tag = 'scratch operand']
  %s0 = inlined_call_operand.vmem [shape: bf16[3,16,16], index: 0, kind: input, shape index: {}]
  %s1 = inlined_call_operand.vmem [shape: bf16[3,128,128], index: 1, kind: input, shape index: {}]
  %s2 = inlined_call_operand.vmem [shape: bf16[16,128], index: 2, kind: input, shape index: {}]
  %s3 = inlined_call_operand.vmem [shape: f32[3,16,128], index: 3, kind: input, shape index: {}]
  %s4 = inlined_call_operand.vmem [shape: f32[3,8,128], index: 4, kind: output, shape index: {}]
  %s5 = sld [smem:[#allocation0]]
  $region57: #{_forward_impl.2} parent=0
    _
  %s7 = ssub.s32 1, %s5
  %s8 = scalar_select 0, %s7, %s5
  loop: start=0, step=1, limit=5
  $region2: #{_forward_impl.2} parent=0 // loop_pre_header
    _
  $region3: #{_forward_impl.2} parent=0 // loop_header
    %s10 = sphi 0, %s14
    %p11 = scmp.ge.s32.totalorder %s10, 5
    %s17 = sphi 0, %s29
    %s18 = sphi 0, %s25
    %s19 = sphi 0, %s17
    %s20 = sphi 0, %s18
    %s21 = sphi 0, %s19
    %s22 = sphi 0, %s20
    %s32 = sphi 0, %s34
    %s35 = sphi 0, %s32
    %s36 = sphi 0, %s35
    %s52 = sphi 0, %s36
    %s58 = sphi 0, %s60
    %s61 = sphi 0, %s58
    %s62 = sphi 0, %s61
    %s78 = sphi 0, %s62
    %s84 = sphi 0, %s86
    %s87 = sphi 0, %s84
    %s88 = sphi 0, %s87
    %s104 = sphi 0, %s88
    %s112 = sphi 0, %s114
    %s115 = sphi 0, %s112
    %s116 = sphi 0, %s115
    %s132 = sphi 0, %s116
    %s138 = sphi 0, %s140
    %s141 = sphi 0, %s138
    %s142 = sphi 0, %s141
    %s158 = sphi 0, %s142
  $region4: #{_forward_impl.2} parent=0 // loop_header_branch
    %13 = sbr.rel (%p11) target = $region8
  $region5: #{_forward_impl.2} parent=0 // loop_body
    %s15 = ssub.s32 %s10, 1
    %s16 = ssub.s32 %s10, 2
    %s23 = sadd.s32 1, %s18
    %p24 = scmp.ge.s32.totalorder %s23, 1
    %s25 = scalar_select %p24, 0, %s23
    %s26 = sadd.s32 1, %s17
    %s27 = scalar_select %p24, %s26, %s17
    %p28 = scmp.ge.s32.totalorder %s27, 3
    %s29 = scalar_select %p28, 0, %s27
    %s30 = ssub.s32 %s17, %s29
    %p31 = scmp.eq.s32.totalorder %s30, 0
    %s33 = sadd.s32 %s32, 1
    %s34 = scalar_select %p31, %s32, %s33
    %p37 = pneg %p31
    %p38 = scmp.eq.s32.totalorder %s10, 2
    %p39 = por %p37, %p38
    %p40 = scmp.ne.s32.totalorder %s32, %s35
    %p41 = scmp.eq.s32.totalorder %s10, 0
    %p42 = por %p40, %p41
    %p43 = scmp.ne.s32.totalorder %s32, %s35
    %p44 = scmp.eq.s32.totalorder %s15, 2
    %p45 = por %p43, %p44
    %p46 = scmp.ne.s32.totalorder %s35, %s36
    %p47 = scmp.eq.s32.totalorder %s15, 0
    %p48 = por %p46, %p47
    %p49 = scmp.ne.s32.totalorder %s35, %s36
    %p50 = scmp.eq.s32.totalorder %s16, 2
    %p51 = por %p49, %p50
    %p53 = scmp.ne.s32.totalorder %s36, %s52
    %p54 = scmp.eq.s32.totalorder %s16, 0
    %p55 = por %p53, %p54
    %s56 = ssub.s32 %s17, %s29
    %p57 = scmp.eq.s32.totalorder %s56, 0
    %s59 = sadd.s32 %s58, 1
    %s60 = scalar_select %p57, %s58, %s59
    %p63 = pneg %p57
    %p64 = scmp.eq.s32.totalorder %s10, 2
    %p65 = por %p63, %p64
    %p66 = scmp.ne.s32.totalorder %s58, %s61
    %p67 = scmp.eq.s32.totalorder %s10, 0
    %p68 = por %p66, %p67
    %p69 = scmp.ne.s32.totalorder %s58, %s61
    %p70 = scmp.eq.s32.totalorder %s15, 2
    %p71 = por %p69, %p70
    %p72 = scmp.ne.s32.totalorder %s61, %s62
    %p73 = scmp.eq.s32.totalorder %s15, 0
    %p74 = por %p72, %p73
    %p75 = scmp.ne.s32.totalorder %s61, %s62
    %p76 = scmp.eq.s32.totalorder %s16, 2
    %p77 = por %p75, %p76
    %p79 = scmp.ne.s32.totalorder %s62, %s78
    %p80 = scmp.eq.s32.totalorder %s16, 0
    %p81 = por %p79, %p80
    %s82 = ssub.s32 %s18, %s25
    %p83 = scmp.eq.s32.totalorder %s82, 0
    %s85 = sadd.s32 %s84, 1
    %s86 = scalar_select %p83, %s84, %s85
    %p89 = pneg %p83
    %p90 = scmp.eq.s32.totalorder %s10, 2
    %p91 = por %p89, %p90
    %p92 = scmp.ne.s32.totalorder %s84, %s87
    %p93 = scmp.eq.s32.totalorder %s10, 0
    %p94 = por %p92, %p93
    %p95 = scmp.ne.s32.totalorder %s84, %s87
    %p96 = scmp.eq.s32.totalorder %s15, 2
    %p97 = por %p95, %p96
    %p98 = scmp.ne.s32.totalorder %s87, %s88
    %p99 = scmp.eq.s32.totalorder %s15, 0
    %p100 = por %p98, %p99
    %p101 = scmp.ne.s32.totalorder %s87, %s88
    %p102 = scmp.eq.s32.totalorder %s16, 2
    %p103 = por %p101, %p102
    %p105 = scmp.ne.s32.totalorder %s88, %s104
    %p106 = scmp.eq.s32.totalorder %s16, 0
    %p107 = por %p105, %p106
    %s108 = ssub.s32 %s17, %s29
    %s109 = ssub.s32 %s18, %s25
    %s110 = sor.u32 %s108, %s109
    %p111 = scmp.eq.s32.totalorder %s110, 0
    %s113 = sadd.s32 %s112, 1
    %s114 = scalar_select %p111, %s112, %s113
    %p117 = pneg %p111
    %p118 = scmp.eq.s32.totalorder %s10, 2
    %p119 = por %p117, %p118
    %p120 = scmp.ne.s32.totalorder %s112, %s115
    %p121 = scmp.eq.s32.totalorder %s10, 0
    %p122 = por %p120, %p121
    %p123 = scmp.ne.s32.totalorder %s112, %s115
    %p124 = scmp.eq.s32.totalorder %s15, 2
    %p125 = por %p123, %p124
    %p126 = scmp.ne.s32.totalorder %s115, %s116
    %p127 = scmp.eq.s32.totalorder %s15, 0
    %p128 = por %p126, %p127
    %p129 = scmp.ne.s32.totalorder %s115, %s116
    %p130 = scmp.eq.s32.totalorder %s16, 2
    %p131 = por %p129, %p130
    %p133 = scmp.ne.s32.totalorder %s116, %s132
    %p134 = scmp.eq.s32.totalorder %s16, 0
    %p135 = por %p133, %p134
    %s136 = ssub.s32 %s17, %s29
    %p137 = scmp.eq.s32.totalorder %s136, 0
    %s139 = sadd.s32 %s138, 1
    %s140 = scalar_select %p137, %s138, %s139
    %p143 = pneg %p137
    %p144 = scmp.eq.s32.totalorder %s10, 2
    %p145 = por %p143, %p144
    %p146 = scmp.ne.s32.totalorder %s138, %s141
    %p147 = scmp.eq.s32.totalorder %s10, 0
    %p148 = por %p146, %p147
    %p149 = scmp.ne.s32.totalorder %s138, %s141
    %p150 = scmp.eq.s32.totalorder %s15, 2
    %p151 = por %p149, %p150
    %p152 = scmp.ne.s32.totalorder %s141, %s142
    %p153 = scmp.eq.s32.totalorder %s15, 0
    %p154 = por %p152, %p153
    %p155 = scmp.ne.s32.totalorder %s141, %s142
    %p156 = scmp.eq.s32.totalorder %s16, 2
    %p157 = por %p155, %p156
    %p159 = scmp.ne.s32.totalorder %s142, %s158
    %p160 = scmp.eq.s32.totalorder %s16, 0
    %p161 = por %p159, %p160
    %p162 = scmp.le.s32.totalorder 1, %s10
    %p163 = scmp.lt.s32.totalorder %s10, 4
    %p164 = pnand %p162, %p163
    %p165 = pneg %p164
    // Predicated region
    $region9: #{_forward_impl.2} parent=5 // pred_check
      _
    $region10: #{_forward_impl.2} parent=5 // pred_check_branch
      %167 = sbr.rel (%p164) target = $region12
    $region11: #{_forward_impl.2} parent=5 // pred_region
      %s168 = ssub.s32 %s10, 1
      // Predicated region
      $region13: #{_forward_impl.2} parent=11 // pred_check
        %p169 = pneg %p100
      $region14: #{_forward_impl.2} parent=11 // pred_check_branch
        %171 = sbr.rel (%p169) target = $region16
      $region15: #{_forward_impl.2} parent=11 // pred_region
        %p172 = scmp.lt.s32.totalorder %s20, 0
        %s173 = scalar_select %p172, %s20, 0
        %s174 = smul.addr %s173, 4
        %s175 = scalar_lea.vmem %s2, %s174
      $region16: #{_forward_impl.2} parent=11 // pred_fallthru
        _
    $region12: #{_forward_impl.2} parent=5 // pred_fallthru
      _
    %p176 = scmp.lt.s32.totalorder %s10, 3
    // Predicated region
    $region17: #{_forward_impl.2} parent=5 // pred_check
      %p177 = pneg %p176
    $region18: #{_forward_impl.2} parent=5 // pred_check_branch
      %179 = sbr.rel (%p177) target = $region20
    $region19: #{_forward_impl.2} parent=5 // pred_region
      // Predicated region
      $region21: #{_forward_impl.2} parent=19 // pred_check
        %p180 = pneg %p42
      $region22: #{_forward_impl.2} parent=19 // pred_check_branch
        %182 = sbr.rel (%p180) target = $region24
      $region23: #{_forward_impl.2} parent=19 // pred_region
        %p183 = scmp.lt.s32.totalorder %s17, 2
        %s184 = scalar_select %p183, %s17, 2
        %s185 = smul.addr %s184, 2
        %s186 = smul.addr %s185, 4
        %s187 = scalar_lea.vmem %s0, %s186
      $region24: #{_forward_impl.2} parent=19 // pred_fallthru
        _
      // Predicated region
      $region25: #{_forward_impl.2} parent=19 // pred_check
        %p188 = pneg %p68
      $region26: #{_forward_impl.2} parent=19 // pred_check_branch
        %190 = sbr.rel (%p188) target = $region28
      $region27: #{_forward_impl.2} parent=19 // pred_region
        %p191 = scmp.lt.s32.totalorder %s17, 2
        %s192 = scalar_select %p191, %s17, 2
        %s193 = smul.addr %s192, 16
        %s194 = smul.addr %s193, 4
        %s195 = scalar_lea.vmem %s1, %s194
      $region28: #{_forward_impl.2} parent=19 // pred_fallthru
        _
      // Predicated region
      $region29: #{_forward_impl.2} parent=19 // pred_check
        %p196 = pneg %p122
      $region30: #{_forward_impl.2} parent=19 // pred_check_branch
        %198 = sbr.rel (%p196) target = $region32
      $region31: #{_forward_impl.2} parent=19 // pred_region
        %p199 = scmp.lt.s32.totalorder %s17, 2
        %s200 = scalar_select %p199, %s17, 2
        %p201 = scmp.lt.s32.totalorder %s18, 0
        %s202 = scalar_select %p201, %s18, 0
        %s203 = smul.addr %s200, 2
        %s204 = sadd.s32 %s202, %s203
        %s205 = smul.addr %s204, 8
        %s206 = scalar_lea.vmem %s3, %s205
      $region32: #{_forward_impl.2} parent=19 // pred_fallthru
        _
    $region20: #{_forward_impl.2} parent=5 // pred_fallthru
      _
    %p207 = scmp.le.s32.totalorder 1, %s10
    %p208 = scmp.lt.s32.totalorder %s10, 4
    %p209 = pnand %p207, %p208
    %p210 = pneg %p209
    // Predicated region
    $region33: #{_forward_impl.2} parent=5 // pred_check
      _
    $region34: #{_forward_impl.2} parent=5 // pred_check_branch
      %212 = sbr.rel (%p209) target = $region36
    $region35: #{_forward_impl.2} parent=5 // pred_region
      %s213 = ssub.s32 %s10, 1
      %p214 = scmp.lt.s32.totalorder %s19, 2
      %s215 = scalar_select %p214, %s19, 2
      %s216 = smul.addr %s215, 2
      %s217 = smul.addr %s216, 4
      %s218 = scalar_lea.vmem %s0, %s217
      %p219 = pneg %p48
      %p220 = pneg %p45
      %p221 = scmp.lt.s32.totalorder %s19, 2
      %s222 = scalar_select %p221, %s19, 2
      %s223 = smul.addr %s222, 16
      %s224 = smul.addr %s223, 4
      %s225 = scalar_lea.vmem %s1, %s224
      %p226 = pneg %p74
      %p227 = pneg %p71
      %p228 = scmp.lt.s32.totalorder %s20, 0
      %s229 = scalar_select %p228, %s20, 0
      %s230 = smul.addr %s229, 4
      %s231 = scalar_lea.vmem %s2, %s230
      %p232 = pneg %p100
      %p233 = pneg %p97
      %p234 = scmp.lt.s32.totalorder %s19, 2
      %s235 = scalar_select %p234, %s19, 2
      %p236 = scmp.lt.s32.totalorder %s20, 0
      %s237 = scalar_select %p236, %s20, 0
      %s238 = smul.addr %s235, 2
      %s239 = sadd.s32 %s237, %s238
      %s240 = smul.addr %s239, 8
      %s241 = scalar_lea.vmem %s3, %s240
      %p242 = pneg %p128
      %p243 = pneg %p125
      %p244 = pneg %p154
      %p245 = pneg %p151
      %p246 = scmp.lt.s32.totalorder %s19, 2
      %s247 = scalar_select %p246, %s19, 2
      %s248 = smul.addr %s247, 8
      %s249 = scalar_lea.vmem %s4, %s248
      %p250 = scmp.lt.s32.totalorder %s19, 2
      %s251 = scalar_select %p250, %s19, 2
      %s252 = smul.addr %s251, 2
      %s253 = smul.addr %s252, 4
      %s254 = scalar_lea.vmem %s0, %s253
      %p255 = scmp.lt.s32.totalorder %s19, 2
      %s256 = scalar_select %p255, %s19, 2
      %s257 = smul.addr %s256, 16
      %s258 = smul.addr %s257, 4
      %s259 = scalar_lea.vmem %s1, %s258
      %p260 = scmp.lt.s32.totalorder %s20, 0
      %s261 = scalar_select %p260, %s20, 0
      %s262 = smul.addr %s261, 4
      %s263 = scalar_lea.vmem %s2, %s262
      %p264 = scmp.lt.s32.totalorder %s19, 2
      %s265 = scalar_select %p264, %s19, 2
      %p266 = scmp.lt.s32.totalorder %s20, 0
      %s267 = scalar_select %p266, %s20, 0
      %s268 = smul.addr %s265, 2
      %s269 = sadd.s32 %s267, %s268
      %s270 = smul.addr %s269, 8
      %s271 = scalar_lea.vmem %s3, %s270
      %p272 = scmp.lt.s32.totalorder %s19, 2
      %s273 = scalar_select %p272, %s19, 2
      %s274 = smul.addr %s273, 8
      %s275 = scalar_lea.vmem %s4, %s274
      %p277 = scmp.eq.s32.totalorder %s20, 0
      // Predicated region
      $region37: #{_forward_impl.2} parent=35 // pred_check
        %p278 = pneg %p277
      $region38: #{_forward_impl.2} parent=35 // pred_check_branch
        %280 = sbr.rel (%p278) target = $region40
      $region39: #{_forward_impl.2} parent=35 // pred_region
        %281 = vst [vmem:[#allocation2] sm:$0xff] 0.0
        %282 = vst [vmem:[#allocation2 + $0x8] sm:$0xff] 0.0
      $region40: #{_forward_impl.2} parent=35 // pred_fallthru
        _
      %v283 = vld [vmem:[%s254] sm:$0xf]
      %v284 = vld [vmem:[%s254 + $0x4] sm:$0xf]
      %v285 = vld [vmem:[%s263] sm:$0xf]
      %v286 = vld [vmem:[%s263 + $0x4] sm:$0xf]
      %v289 = vunpack.c.l.b16 %v283
      %v290 = vunpack.c.l.b16 %v284
      %v291 = vpack.c.b16 %v290, %v289
      %v294 = vunpack.c.l.b16 %v285
      %v295 = vunpack.c.l.b16 %v286
      %v296 = vpack.c.b16 %v295, %v294
      %vm298 = vcmask 130048
      %v300 = vsel %vm298, %v291, 0
      %302 = vmatprep.subr.bf16.mxu0 0
      %303 = vmatpush1.bf16.msra.mxu0 %v296
      %304 = vmatprep.subr.bf16.mxu0 0
      %305 = vmatpush1.bf16.msra.mxu0 0
      %306 = vmatprep.subr.bf16.mxu0 0
      %307 = vmatpush1.bf16.msra.mxu0 0
      %308 = vmatprep.subr.bf16.mxu0 0
      %309 = vmatpush1.bf16.msra.mxu0 0
      %310 = vmatprep.subr.bf16.mxu0 0
      %311 = vmatpush1.bf16.msra.mxu0 0
      %312 = vmatprep.subr.bf16.mxu0 0
      %313 = vmatpush1.bf16.msra.mxu0 0
      %314 = vmatprep.subr.bf16.mxu0 0
      %315 = vmatpush1.bf16.msra.mxu0 0
      %316 = vmatprep.subr.bf16.mxu0 0
      %317 = vmatpush1.bf16.msra.mxu0 0
      %318 = vmatprep.subr.bf16.mxu0 0
      %319 = vmatpush1.bf16.msra.mxu0 0
      %320 = vmatprep.subr.bf16.mxu0 0
      %321 = vmatpush1.bf16.msra.mxu0 0
      %322 = vmatprep.subr.bf16.mxu0 0
      %323 = vmatpush1.bf16.msra.mxu0 0
      %324 = vmatprep.subr.bf16.mxu0 0
      %325 = vmatpush1.bf16.msra.mxu0 0
      %326 = vmatprep.subr.bf16.mxu0 0
      %327 = vmatpush1.bf16.msra.mxu0 0
      %328 = vmatprep.subr.bf16.mxu0 0
      %329 = vmatpush1.bf16.msra.mxu0 0
      %330 = vmatprep.subr.bf16.mxu0 0
      %331 = vmatpush1.bf16.msra.mxu0 0
      %332 = vmatprep.subr.bf16.mxu0 0
      %333 = vmatpush1.bf16.msra.mxu0 0
      %334 = vmatprep.mubr.bf16.mxu0 0
      %335 = vmatmul.mubr.bf16.gmra.mrb[0].mxu0 %v300
      %v336 = vpop.f32.mrb[0].mxu0
      %v337 = vadd.f32 0.0, %v336
      %v338 = vpop.f32.mrb[0].mxu0
      %v339 = vpop.f32.mrb[0].mxu0
      %v340 = vadd.f32 0.0, %v339
      %v341 = vpop.f32.mrb[0].mxu0
      %342 = vdwg.mxu0
      %v343 = vpack.c.bf16 %v340, %v337
      %v344 = vld [vmem:[%s259] sm:$0xf]
      %v345 = vld [vmem:[%s259 + $0x4] sm:$0xf]
      %v346 = vld [vmem:[%s259 + $0x8] sm:$0xf]
      %v347 = vld [vmem:[%s259 + $0xc] sm:$0xf]
      %v348 = vld [vmem:[%s259 + $0x10] sm:$0xf]
      %v349 = vld [vmem:[%s259 + $0x14] sm:$0xf]
      %v350 = vld [vmem:[%s259 + $0x18] sm:$0xf]
      %v351 = vld [vmem:[%s259 + $0x1c] sm:$0xf]
      %v352 = vld [vmem:[%s259 + $0x20] sm:$0xf]
      %v353 = vld [vmem:[%s259 + $0x24] sm:$0xf]
      %v354 = vld [vmem:[%s259 + $0x28] sm:$0xf]
      %v355 = vld [vmem:[%s259 + $0x2c] sm:$0xf]
      %v356 = vld [vmem:[%s259 + $0x30] sm:$0xf]
      %v357 = vld [vmem:[%s259 + $0x34] sm:$0xf]
      %v358 = vld [vmem:[%s259 + $0x38] sm:$0xf]
      %v359 = vld [vmem:[%s259 + $0x3c] sm:$0xf]
      %v376 = vunpack.c.l.b16 %v344
      %v377 = vunpack.c.l.b16 %v345
      %v378 = vunpack.c.l.b16 %v346
      %v379 = vunpack.c.l.b16 %v347
      %v380 = vunpack.c.l.b16 %v348
      %v381 = vunpack.c.l.b16 %v349
      %v382 = vunpack.c.l.b16 %v350
      %v383 = vunpack.c.l.b16 %v351
      %v384 = vunpack.c.l.b16 %v352
      %v385 = vunpack.c.l.b16 %v353
      %v386 = vunpack.c.l.b16 %v354
      %v387 = vunpack.c.l.b16 %v355
      %v388 = vunpack.c.l.b16 %v356
      %v389 = vunpack.c.l.b16 %v357
      %v390 = vunpack.c.l.b16 %v358
      %v391 = vunpack.c.l.b16 %v359
      %v392 = vpack.c.b16 %v377, %v376
      %v393 = vpack.c.b16 %v379, %v378
      %v394 = vpack.c.b16 %v381, %v380
      %v395 = vpack.c.b16 %v383, %v382
      %v396 = vpack.c.b16 %v385, %v384
      %v397 = vpack.c.b16 %v387, %v386
      %v398 = vpack.c.b16 %v389, %v388
      %v399 = vpack.c.b16 %v391, %v390
      %408 = vmatprep.subr.bf16.mxu0 0
      %409 = vmatpush1.bf16.msra.mxu0 %v392
      %410 = vmatprep.subr.bf16.mxu0 0
      %411 = vmatpush1.bf16.msra.mxu0 %v393
      %412 = vmatprep.subr.bf16.mxu0 0
      %413 = vmatpush1.bf16.msra.mxu0 %v394
      %414 = vmatprep.subr.bf16.mxu0 0
      %415 = vmatpush1.bf16.msra.mxu0 %v395
      %416 = vmatprep.subr.bf16.mxu0 0
      %417 = vmatpush1.bf16.msra.mxu0 %v396
      %418 = vmatprep.subr.bf16.mxu0 0
      %419 = vmatpush1.bf16.msra.mxu0 %v397
      %420 = vmatprep.subr.bf16.mxu0 0
      %421 = vmatpush1.bf16.msra.mxu0 %v398
      %422 = vmatprep.subr.bf16.mxu0 0
      %423 = vmatpush1.bf16.msra.mxu0 %v399
      %424 = vmatprep.subr.bf16.mxu0 0
      %425 = vmatpush1.bf16.msra.mxu0 0
      %426 = vmatprep.subr.bf16.mxu0 0
      %427 = vmatpush1.bf16.msra.mxu0 0
      %428 = vmatprep.subr.bf16.mxu0 0
      %429 = vmatpush1.bf16.msra.mxu0 0
      %430 = vmatprep.subr.bf16.mxu0 0
      %431 = vmatpush1.bf16.msra.mxu0 0
      %432 = vmatprep.subr.bf16.mxu0 0
      %433 = vmatpush1.bf16.msra.mxu0 0
      %434 = vmatprep.subr.bf16.mxu0 0
      %435 = vmatpush1.bf16.msra.mxu0 0
      %436 = vmatprep.subr.bf16.mxu0 0
      %437 = vmatpush1.bf16.msra.mxu0 0
      %438 = vmatprep.subr.bf16.mxu0 0
      %439 = vmatpush1.bf16.msra.mxu0 0
      %440 = vmatprep.mubr.bf16.mxu0 0
      %441 = vmatmul.mubr.bf16.gmra.mrb[0].mxu0 %v343
      %v442 = vpop.f32.mrb[0].mxu0
      %v443 = vadd.f32 0.0, %v442
      %v444 = vpop.f32.mrb[0].mxu0
      %v445 = vpop.f32.mrb[0].mxu0
      %v446 = vadd.f32 0.0, %v445
      %v447 = vpop.f32.mrb[0].mxu0
      %448 = vdwg.mxu0
      %v449 = vld [vmem:[#allocation2] sm:$0xff]
      %v450 = vld [vmem:[#allocation2 + $0x8] sm:$0xff]
      %v451 = vld [vmem:[%s271] sm:$0xff]
      %v452 = vld [vmem:[%s271 + $0x8] sm:$0xff]
      %v453 = vsub.f32 %v451, %v443
      %v454 = vsub.f32 %v452, %v446
      %v455 = vand.u32 2147483647, %v453
      %v456 = vand.u32 2147483647, %v454
      %v457 = vadd.f32 %v449, %v455
      %v458 = vadd.f32 %v450, %v456
      %459 = vst [vmem:[#allocation2] sm:$0xff] %v457
      %460 = vst [vmem:[#allocation2 + $0x8] sm:$0xff] %v458
      // Predicated region
      $region41: #{_forward_impl.2} parent=35 // pred_check
        %p461 = pneg %p277
      $region42: #{_forward_impl.2} parent=35 // pred_check_branch
        %463 = sbr.rel (%p461) target = $region44
      $region43: #{_forward_impl.2} parent=35 // pred_region
        %v464 = vld [vmem:[#allocation2] sm:$0xff]
        %v465 = vld [vmem:[#allocation2 + $0x8] sm:$0xff]
        %v466 = vadd.f32 %v464, %v465
        %467 = vadd.xlane.f32.xlu0 %v466
        %v468 = vpop.xlane.xlu0 %467
        %v469 = vrot.slane %v468, 4
        %v470 = vadd.f32 %v468, %v469
        %v471 = vrot.slane %v470, 2
        %v472 = vadd.f32 %v470, %v471
        %v473 = vrot.slane %v472, 1
        %v474 = vadd.f32 %v472, %v473
        %s475 = vtos %v474
        %v476 = vstv %s475
        %v477 = vadd.f32 %v476, 0.0
        %478 = vst [vmem:[%s275] sm:$0xff] %v477
      $region44: #{_forward_impl.2} parent=35 // pred_fallthru
        _
      %p479 = scmp.lt.s32.totalorder %s19, 2
      %s480 = scalar_select %p479, %s19, 2
      %s481 = smul.addr %s480, 8
      %s482 = scalar_lea.vmem %s4, %s481
      // Predicated region
      $region45: #{_forward_impl.2} parent=35 // pred_check
        %p483 = pneg %p151
      $region46: #{_forward_impl.2} parent=35 // pred_check_branch
        %485 = sbr.rel (%p483) target = $region48
      $region47: #{_forward_impl.2} parent=35 // pred_region
        _
      $region48: #{_forward_impl.2} parent=35 // pred_fallthru
        _
    $region36: #{_forward_impl.2} parent=5 // pred_fallthru
      _
    %p486 = scmp.le.s32.totalorder 2, %s10
    // Predicated region
    $region49: #{_forward_impl.2} parent=5 // pred_check
      %p487 = pneg %p486
    $region50: #{_forward_impl.2} parent=5 // pred_check_branch
      %489 = sbr.rel (%p487) target = $region52
    $region51: #{_forward_impl.2} parent=5 // pred_region
      %s490 = ssub.s32 %s10, 2
      // Predicated region
      $region53: #{_forward_impl.2} parent=51 // pred_check
        %p491 = pneg %p157
      $region54: #{_forward_impl.2} parent=51 // pred_check_branch
        %493 = sbr.rel (%p491) target = $region56
      $region55: #{_forward_impl.2} parent=51 // pred_region
        %p494 = scmp.lt.s32.totalorder %s21, 2
        %s495 = scalar_select %p494, %s21, 2
        %s496 = smul.addr %s495, 8
        %s497 = scalar_lea.vmem %s4, %s496
      $region56: #{_forward_impl.2} parent=51 // pred_fallthru
        _
    $region52: #{_forward_impl.2} parent=5 // pred_fallthru
      _
  $region6: #{_forward_impl.2} parent=0 // loop_footer
    %s14 = sadd.s32 1, %s10
  $region7: #{_forward_impl.2} parent=0 // loop_footer_branch
    %9 = sbr.rel target = $region3
  $region8: #{_forward_impl.2} parent=0 // loop_exit
    _

// kernel: _forward_impl.3
$region0: #{_forward_impl.3}
  #allocation0 [shape = 'u32[]', space=smem, size = 0x4, offset = 0x4, fixed_abs, tag = 'smem constant byte address 0x4 - core index']
  #allocation1 [shape = 'u32[144,128]{1,0:T(1,128)}', space=vmem, size = 0x12000, scoped, tag = 'internal scratch']
  #allocation2 [shape = 'f32[8,128]{1,0:T(8,128)}', space=vmem, size = 0x1000, scoped, tag = 'scratch operand']
  #allocation3 [shape = 'f32[8,128]{1,0:T(8,128)}', space=vmem, size = 0x1000, scoped, tag = 'scratch operand']
  #allocation4 [shape = 's32[1]{0}', space=sflag, size = 0x4, scoped, tag = 'scoped memory for _forward_impl.3']
  #allocation5 [shape = 'u8[512]{0}', space=smem, size = 0x200, scoped, tag = 'prefetched SMEM operand 0']
  #allocation6 [shape = 'u8[512]{0}', space=smem, size = 0x200, scoped, tag = 'prefetched SMEM operand 1']
  %s0 = inlined_call_operand.vmem [shape: s32[3], index: 0, kind: input, shape index: {}]
  %s1 = inlined_call_operand.vmem [shape: s32[3], index: 1, kind: input, shape index: {}]
  %s2 = inlined_call_operand.vmem [shape: f32[24,128], index: 2, kind: input, shape index: {}]
  %s3 = inlined_call_operand.vmem [shape: f32[3,8,128], index: 3, kind: output, shape index: {0}]
  %s4 = inlined_call_operand.vmem [shape: f32[3,8,128], index: 4, kind: output, shape index: {1}]
  %5 = xla_tuple %s3, %s4
  %s6 = sld [smem:[#allocation0]]
  $region57: #{_forward_impl.3} parent=0
    _
  %s8 = ssub.s32 1, %s6
  %s9 = scalar_select 0, %s8, %s6
  %s10 = sshll.u32 %s0, 4
  %s11 = int_to_ptr.vmem [resolvable:$true] %s10
  %13 = dma.vmem_to_smem %s11, 16, [#allocation5], [#allocation4]
  %s14 = sshll.u32 %s1, 4
  %s15 = int_to_ptr.vmem [resolvable:$true] %s14
  %17 = dma.vmem_to_smem %s15, 16, [#allocation6], [#allocation4]
  %18 = dma.done [#allocation4], 32
  %19 = sfence
  loop: start=0, step=1, limit=5
  $region2: #{_forward_impl.3} parent=0 // loop_pre_header
    _
  $region3: #{_forward_impl.3} parent=0 // loop_header
    %s21 = sphi 0, %s25
    %p22 = scmp.ge.s32.totalorder %s21, 5
    %s28 = sphi 0, %s40
    %s29 = sphi 0, %s36
    %s30 = sphi 0, %s28
    %s31 = sphi 0, %s29
    %s32 = sphi 0, %s30
    %s33 = sphi 0, %s31
    %s47 = sphi 0, %s49
    %s50 = sphi 0, %s47
    %s51 = sphi 0, %s50
    %s67 = sphi 0, %s51
    %s73 = sphi 0, %s75
    %s76 = sphi 0, %s73
    %s77 = sphi 0, %s76
    %s93 = sphi 0, %s77
    %s99 = sphi 0, %s101
    %s102 = sphi 0, %s99
    %s103 = sphi 0, %s102
    %s119 = sphi 0, %s103
  $region4: #{_forward_impl.3} parent=0 // loop_header_branch
    %24 = sbr.rel (%p22) target = $region8
  $region5: #{_forward_impl.3} parent=0 // loop_body
    %s26 = ssub.s32 %s21, 1
    %s27 = ssub.s32 %s21, 2
    %s34 = sadd.s32 1, %s29
    %p35 = scmp.ge.s32.totalorder %s34, 1
    %s36 = scalar_select %p35, 0, %s34
    %s37 = sadd.s32 1, %s28
    %s38 = scalar_select %p35, %s37, %s28
    %p39 = scmp.ge.s32.totalorder %s38, 3
    %s40 = scalar_select %p39, 0, %s38
    %s41 = sld [smem:[#allocation5 + %s28]]
    %s42 = sadd.s32 %s41, %s29
    %s43 = sld [smem:[#allocation5 + %s40]]
    %s44 = sadd.s32 %s43, %s36
    %s45 = ssub.s32 %s42, %s44
    %p46 = scmp.eq.s32.totalorder %s45, 0
    %s48 = sadd.s32 %s47, 1
    %s49 = scalar_select %p46, %s47, %s48
    %p52 = pneg %p46
    %p53 = scmp.eq.s32.totalorder %s21, 2
    %p54 = por %p52, %p53
    %p55 = scmp.ne.s32.totalorder %s47, %s50
    %p56 = scmp.eq.s32.totalorder %s21, 0
    %p57 = por %p55, %p56
    %p58 = scmp.ne.s32.totalorder %s47, %s50
    %p59 = scmp.eq.s32.totalorder %s26, 2
    %p60 = por %p58, %p59
    %p61 = scmp.ne.s32.totalorder %s50, %s51
    %p62 = scmp.eq.s32.totalorder %s26, 0
    %p63 = por %p61, %p62
    %p64 = scmp.ne.s32.totalorder %s50, %s51
    %p65 = scmp.eq.s32.totalorder %s27, 2
    %p66 = por %p64, %p65
    %p68 = scmp.ne.s32.totalorder %s51, %s67
    %p69 = scmp.eq.s32.totalorder %s27, 0
    %p70 = por %p68, %p69
    %s71 = ssub.s32 %s28, %s40
    %p72 = scmp.eq.s32.totalorder %s71, 0
    %s74 = sadd.s32 %s73, 1
    %s75 = scalar_select %p72, %s73, %s74
    %p78 = pneg %p72
    %p79 = scmp.eq.s32.totalorder %s21, 2
    %p80 = por %p78, %p79
    %p81 = scmp.ne.s32.totalorder %s73, %s76
    %p82 = scmp.eq.s32.totalorder %s21, 0
    %p83 = por %p81, %p82
    %p84 = scmp.ne.s32.totalorder %s73, %s76
    %p85 = scmp.eq.s32.totalorder %s26, 2
    %p86 = por %p84, %p85
    %p87 = scmp.ne.s32.totalorder %s76, %s77
    %p88 = scmp.eq.s32.totalorder %s26, 0
    %p89 = por %p87, %p88
    %p90 = scmp.ne.s32.totalorder %s76, %s77
    %p91 = scmp.eq.s32.totalorder %s27, 2
    %p92 = por %p90, %p91
    %p94 = scmp.ne.s32.totalorder %s77, %s93
    %p95 = scmp.eq.s32.totalorder %s27, 0
    %p96 = por %p94, %p95
    %s97 = ssub.s32 %s28, %s40
    %p98 = scmp.eq.s32.totalorder %s97, 0
    %s100 = sadd.s32 %s99, 1
    %s101 = scalar_select %p98, %s99, %s100
    %p104 = pneg %p98
    %p105 = scmp.eq.s32.totalorder %s21, 2
    %p106 = por %p104, %p105
    %p107 = scmp.ne.s32.totalorder %s99, %s102
    %p108 = scmp.eq.s32.totalorder %s21, 0
    %p109 = por %p107, %p108
    %p110 = scmp.ne.s32.totalorder %s99, %s102
    %p111 = scmp.eq.s32.totalorder %s26, 2
    %p112 = por %p110, %p111
    %p113 = scmp.ne.s32.totalorder %s102, %s103
    %p114 = scmp.eq.s32.totalorder %s26, 0
    %p115 = por %p113, %p114
    %p116 = scmp.ne.s32.totalorder %s102, %s103
    %p117 = scmp.eq.s32.totalorder %s27, 2
    %p118 = por %p116, %p117
    %p120 = scmp.ne.s32.totalorder %s103, %s119
    %p121 = scmp.eq.s32.totalorder %s27, 0
    %p122 = por %p120, %p121
    %p123 = scmp.le.s32.totalorder 1, %s21
    %p124 = scmp.lt.s32.totalorder %s21, 4
    %p125 = pnand %p123, %p124
    %p126 = pneg %p125
    // Predicated region
    $region9: #{_forward_impl.3} parent=5 // pred_check
      _
    $region10: #{_forward_impl.3} parent=5 // pred_check_branch
      %128 = sbr.rel (%p125) target = $region12
    $region11: #{_forward_impl.3} parent=5 // pred_region
      %s129 = ssub.s32 %s21, 1
    $region12: #{_forward_impl.3} parent=5 // pred_fallthru
      _
    %p130 = scmp.lt.s32.totalorder %s21, 3
    // Predicated region
    $region13: #{_forward_impl.3} parent=5 // pred_check
      %p131 = pneg %p130
    $region14: #{_forward_impl.3} parent=5 // pred_check_branch
      %133 = sbr.rel (%p131) target = $region16
    $region15: #{_forward_impl.3} parent=5 // pred_region
      // Predicated region
      $region17: #{_forward_impl.3} parent=15 // pred_check
        %p134 = pneg %p57
      $region18: #{_forward_impl.3} parent=15 // pred_check_branch
        %136 = sbr.rel (%p134) target = $region20
      $region19: #{_forward_impl.3} parent=15 // pred_region
        %s137 = sld [smem:[#allocation5 + %s28]]
        %s138 = sadd.s32 %s137, %s29
        %p139 = scmp.lt.s32.totalorder %s138, 2
        %s140 = scalar_select %p139, %s138, 2
        %s141 = smul.addr %s140, 8
        %s142 = scalar_lea.vmem %s2, %s141
        %s143 = sld [smem:[#allocation5 + %s28]]
        %s144 = sadd.s32 %s143, %s29
      $region20: #{_forward_impl.3} parent=15 // pred_fallthru
        _
    $region16: #{_forward_impl.3} parent=5 // pred_fallthru
      _
    %p145 = scmp.le.s32.totalorder 1, %s21
    %p146 = scmp.lt.s32.totalorder %s21, 4
    %p147 = pnand %p145, %p146
    %p148 = pneg %p147
    // Predicated region
    $region21: #{_forward_impl.3} parent=5 // pred_check
      _
    $region22: #{_forward_impl.3} parent=5 // pred_check_branch
      %150 = sbr.rel (%p147) target = $region24
    $region23: #{_forward_impl.3} parent=5 // pred_region
      %s151 = ssub.s32 %s21, 1
      %s152 = sld [smem:[#allocation5 + %s30]]
      %s153 = sadd.s32 %s152, %s31
      %p154 = scmp.lt.s32.totalorder %s153, 2
      %s155 = scalar_select %p154, %s153, 2
      %s156 = smul.addr %s155, 8
      %s157 = scalar_lea.vmem %s2, %s156
      %p158 = pneg %p63
      %p159 = pneg %p60
      %p160 = pneg %p89
      %p161 = pneg %p86
      %p162 = scmp.lt.s32.totalorder %s30, 2
      %s163 = scalar_select %p162, %s30, 2
      %s164 = smul.addr %s163, 8
      %s165 = scalar_lea.vmem %s3, %s164
      %p166 = pneg %p115
      %p167 = pneg %p112
      %p168 = scmp.lt.s32.totalorder %s30, 2
      %s169 = scalar_select %p168, %s30, 2
      %s170 = smul.addr %s169, 8
      %s171 = scalar_lea.vmem %s4, %s170
      %s172 = sld [smem:[#allocation5 + %s30]]
      %s173 = sadd.s32 %s172, %s31
      %p174 = scmp.lt.s32.totalorder %s173, 2
      %s175 = scalar_select %p174, %s173, 2
      %s176 = smul.addr %s175, 8
      %s177 = scalar_lea.vmem %s2, %s176
      %s178 = sld [smem:[#allocation5 + %s30]]
      %s179 = sadd.s32 %s178, %s31
      %p180 = scmp.lt.s32.totalorder %s30, 2
      %s181 = scalar_select %p180, %s30, 2
      %s182 = smul.addr %s181, 8
      %s183 = scalar_lea.vmem %s3, %s182
      %p184 = scmp.lt.s32.totalorder %s30, 2
      %s185 = scalar_select %p184, %s30, 2
      %s186 = smul.addr %s185, 8
      %s187 = scalar_lea.vmem %s4, %s186
      %p188 = scmp.eq.s32.totalorder %s31, 0
      // Predicated region
      $region25: #{_forward_impl.3} parent=23 // pred_check
        %p189 = pneg %p188
      $region26: #{_forward_impl.3} parent=23 // pred_check_branch
        %191 = sbr.rel (%p189) target = $region28
      $region27: #{_forward_impl.3} parent=23 // pred_region
        %192 = vst [vmem:[#allocation2] sm:$0xff] 0.0
        %193 = vst [vmem:[#allocation3] sm:$0xff] 0.0
      $region28: #{_forward_impl.3} parent=23 // pred_fallthru
        _
      %s194 = sld [smem:[#allocation6 + %s30]]
      %p195 = scmp.lt.s32.totalorder %s31, %s194
      // Predicated region
      $region29: #{_forward_impl.3} parent=23 // pred_check
        %p196 = pneg %p195
      $region30: #{_forward_impl.3} parent=23 // pred_check_branch
        %198 = sbr.rel (%p196) target = $region32
      $region31: #{_forward_impl.3} parent=23 // pred_region
        %v199 = vld [vmem:[%s177] sm:$0xff]
        %v200 = vld [vmem:[#allocation2] sm:$0xff]
        %v201 = vmul.f32 %v199, 3.1415927
        %v202 = vand.u32 2147483647, %v201
        %vm203 = vcmp.le.f32.partialorder %v202, 0.7853982
        %vm204 = vcmp.lt.s32.totalorder %v201, 0
        %v205 = vand.u32 %v201, 2139095040
        %v206 = vshrl.u32 %v205, 23
        %v207 = vsub.s32 %v206, 127
        %v208 = vand.u32 2147483647, %v201
        %v209 = vand.u32 %v208, 8388607
        %v210 = vor.u32 %v209, 8388608
        %v211 = vsub.s32 0, %v210
        %v212 = vadd.s32 %v207, 1
        %vm213 = vcmp.gt.s32.totalorder %v212, 0
        %v214 = vsel %vm213, %v212, 0
        %v215 = vshrl.u32 %v214, 5
        %v216 = vand.u32 %v214, 31
        %v217 = vsub.s32 32, %v216
        %v218 = vshrl.u32 683565275, %v217
        %v219 = vshll.u32 683565275, %v216
        %v220 = vshrl.u32 2475754826, %v217
        %v221 = vor.u32 %v219, %v220
        %v222 = vshll.u32 2475754826, %v216
        %v223 = vshrl.u32 2131351028, %v217
        %v224 = vor.u32 %v222, %v223
        %v225 = vshll.u32 2131351028, %v216
        %v226 = vshrl.u32 2102212464, %v217
        %v227 = vor.u32 %v225, %v226
        %v228 = vshll.u32 2102212464, %v216
        %v229 = vshrl.u32 920167782, %v217
        %v230 = vor.u32 %v228, %v229
        %v231 = vshll.u32 920167782, %v216
        %v232 = vshrl.u32 1326507024, %v217
        %v233 = vor.u32 %v231, %v232
        %vm234 = vcmp.lt.s32.totalorder %v215, 1
        %vm235 = vcmp.lt.s32.totalorder %v215, 2
        %vm236 = vcmp.lt.s32.totalorder %v215, 3
        %vm237 = vcmp.lt.s32.totalorder %v215, 4
        %v238 = vsel %vm234, %v218, %v221
        %v239 = vsel %vm237, %v227, 2102212464
        %v240 = vsel %vm236, %v224, %v239
        %v241 = vsel %vm235, %v238, %v240
        %v242 = vsel %vm234, %v221, %v224
        %v243 = vsel %vm237, %v230, 920167782
        %v244 = vsel %vm236, %v227, %v243
        %v245 = vsel %vm235, %v242, %v244
        %v246 = vsel %vm234, %v224, %v227
        %v247 = vsel %vm237, %v233, 1326507024
        %v248 = vsel %vm236, %v230, %v247
        %v249 = vsel %vm235, %v246, %v248
        %v250 = vshll.u32 %v210, 8
        %v251 = vmul.u32.u64.compose %v250, %v249
        %v252 = vextract.low.u32 %v251
        %v253 = vextract.high.u32 %v251
        %v254 = vmul.u32.u64.compose %v250, %v245
        %v255 = vextract.low.u32 %v254
        %v256 = vextract.high.u32 %v254
        %v257 = vmul.u32 %v250, %v241
        %v258 = vadd.s32 %v253, %v255
        %vm259 = vc.u32 %v253, %v255
        %v260 = vadd.s32 %v256, 1
        %v261 = vsel %vm259, %v260, %v256
        %v262 = vadd.s32 %v257, %v261
        %v263 = vadd.s32 %v262, 536870912
        %v264 = vshrl.u32 %v263, 30
        %v265 = vshll.u32 %v264, 30
        %v266 = vsub.s32 %v262, %v265
        %vm267 = vcmp.lt.s32.totalorder %v266, 0
        %v268 = vsub.s32 0, %v266
        %v269 = vsel %vm267, %v268, %v266
        %v270 = vclz %v269
        %v271 = vsub.s32 %v270, 2
        %vm272 = vcmp.gt.s32.totalorder 0, %v271
        %v273 = vsel %vm272, 0, %v271
        %v274 = vsub.s32 32, %v273
        %v275 = vshll.u32 %v266, %v273
        %v276 = vshrl.u32 %v258, %v274
        %v277 = vor.u32 %v275, %v276
        %v278 = vsub.s32 4294967266, %v273
        %v279 = vadd.s32 %v278, 127
        %v280 = vshll.u32 %v279, 23
        %v281 = vor.u32 4788187, %v280
        %v282 = vand.u32 2147483647, %v281
        %v284 = vcvt.s32.f32 %v277
        %v285 = vmul.f32 %v284, %v282
        %v286 = vxor.u32 %v285, 2147483648
        %v287 = vsel %vm204, %v286, %v285
        %v288 = vsub.s32 4, %v264
        %v289 = vsel %vm204, %v288, %v264
        %v290 = vsel %vm203, %v201, %v287
        %v291 = vsel %vm203, 0, %v289
        %v292 = vcosq.f32.pop %v290
        %v293 = vsinq.f32.pop %v290
        %vm294 = vweird.f32 %v201
        %v295 = vadd.s32 %v291, 3
        %v296 = vand.u32 %v295, 3
        %vm297 = vcmp.lt.s32.totalorder %v296, 2
        %vm298 = vcmp.eq.s32.totalorder %v296, 0
        %v299 = vxor.u32 %v293, 2147483648
        %v300 = vsel %vm298, %v292, %v299
        %vm301 = vcmp.eq.s32.totalorder %v296, 2
        %v302 = vxor.u32 %v292, 2147483648
        %v303 = vsel %vm301, %v302, %v293
        %v304 = vsel %vm297, %v300, %v303
        %v305 = vsel %vm294, nan, %v304
        %v306 = vadd.f32 %v200, %v305
        %307 = vst [vmem:[#allocation2] sm:$0xff] %v306
        %v308 = vld [vmem:[#allocation3] sm:$0xff]
        %v309 = vadd.f32 %v308, %v199
        %310 = vst [vmem:[#allocation3] sm:$0xff] %v309
      $region32: #{_forward_impl.3} parent=23 // pred_fallthru
        _
      // Predicated region
      $region33: #{_forward_impl.3} parent=23 // pred_check
        %p311 = pneg %p188
      $region34: #{_forward_impl.3} parent=23 // pred_check_branch
        %313 = sbr.rel (%p311) target = $region36
      $region35: #{_forward_impl.3} parent=23 // pred_region
        %v314 = vld [vmem:[#allocation2] sm:$0xff]
        %315 = vadd.xlane.f32.xlu0 %v314
        %v316 = vpop.xlane.xlu0 %315
        %v317 = vrot.slane %v316, 4
        %v318 = vadd.f32 %v316, %v317
        %v319 = vrot.slane %v318, 2
        %v320 = vadd.f32 %v318, %v319
        %v321 = vrot.slane %v320, 1
        %v322 = vadd.f32 %v320, %v321
        %s323 = vtos %v322
        %v324 = vstv %s323
        %v325 = vadd.f32 %v324, 0.0
        %326 = vst [vmem:[%s183] sm:$0xff] %v325
        %v327 = vld [vmem:[#allocation3] sm:$0xff]
        %328 = vadd.xlane.f32.xlu0 %v327
        %v329 = vpop.xlane.xlu0 %328
        %v330 = vrot.slane %v329, 4
        %v331 = vadd.f32 %v329, %v330
        %v332 = vrot.slane %v331, 2
        %v333 = vadd.f32 %v331, %v332
        %v334 = vrot.slane %v333, 1
        %v335 = vadd.f32 %v333, %v334
        %s336 = vtos %v335
        %v337 = vstv %s336
        %v338 = vadd.f32 %v337, 0.0
        %339 = vst [vmem:[%s187] sm:$0xff] %v338
      $region36: #{_forward_impl.3} parent=23 // pred_fallthru
        _
      %p340 = scmp.lt.s32.totalorder %s30, 2
      %s341 = scalar_select %p340, %s30, 2
      %s342 = smul.addr %s341, 8
      %s343 = scalar_lea.vmem %s3, %s342
      %p344 = scmp.lt.s32.totalorder %s30, 2
      %s345 = scalar_select %p344, %s30, 2
      %s346 = smul.addr %s345, 8
      %s347 = scalar_lea.vmem %s4, %s346
      // Predicated region
      $region37: #{_forward_impl.3} parent=23 // pred_check
        %p348 = pneg %p86
      $region38: #{_forward_impl.3} parent=23 // pred_check_branch
        %350 = sbr.rel (%p348) target = $region40
      $region39: #{_forward_impl.3} parent=23 // pred_region
        _
      $region40: #{_forward_impl.3} parent=23 // pred_fallthru
        _
      // Predicated region
      $region41: #{_forward_impl.3} parent=23 // pred_check
        %p351 = pneg %p112
      $region42: #{_forward_impl.3} parent=23 // pred_check_branch
        %353 = sbr.rel (%p351) target = $region44
      $region43: #{_forward_impl.3} parent=23 // pred_region
        _
      $region44: #{_forward_impl.3} parent=23 // pred_fallthru
        _
    $region24: #{_forward_impl.3} parent=5 // pred_fallthru
      _
    %p354 = scmp.le.s32.totalorder 2, %s21
    // Predicated region
    $region45: #{_forward_impl.3} parent=5 // pred_check
      %p355 = pneg %p354
    $region46: #{_forward_impl.3} parent=5 // pred_check_branch
      %357 = sbr.rel (%p355) target = $region48
    $region47: #{_forward_impl.3} parent=5 // pred_region
      %s358 = ssub.s32 %s21, 2
      // Predicated region
      $region49: #{_forward_impl.3} parent=47 // pred_check
        %p359 = pneg %p92
      $region50: #{_forward_impl.3} parent=47 // pred_check_branch
        %361 = sbr.rel (%p359) target = $region52
      $region51: #{_forward_impl.3} parent=47 // pred_region
        %p362 = scmp.lt.s32.totalorder %s32, 2
        %s363 = scalar_select %p362, %s32, 2
        %s364 = smul.addr %s363, 8
        %s365 = scalar_lea.vmem %s3, %s364
      $region52: #{_forward_impl.3} parent=47 // pred_fallthru
        _
      // Predicated region
      $region53: #{_forward_impl.3} parent=47 // pred_check
        %p366 = pneg %p118
      $region54: #{_forward_impl.3} parent=47 // pred_check_branch
        %368 = sbr.rel (%p366) target = $region56
      $region55: #{_forward_impl.3} parent=47 // pred_region
        %p369 = scmp.lt.s32.totalorder %s32, 2
        %s370 = scalar_select %p369, %s32, 2
        %s371 = smul.addr %s370, 8
        %s372 = scalar_lea.vmem %s4, %s371
      $region56: #{_forward_impl.3} parent=47 // pred_fallthru
        _
    $region48: #{_forward_impl.3} parent=5 // pred_fallthru
      _
  $region6: #{_forward_impl.3} parent=0 // loop_footer
    %s25 = sadd.s32 1, %s21
  $region7: #{_forward_impl.3} parent=0 // loop_footer_branch
    %20 = sbr.rel target = $region3
  $region8: #{_forward_impl.3} parent=0 // loop_exit
    _

</llo_original>
